<compile_context>
chip_gen: v7x
topology: tpu7x:2x2x1
jax: 0.10.0
libtpu: 0.0.40
codegen_flags: <defaults>
</compile_context>

<pallas_src>
import functools

import jax
import jax.numpy as jnp
import numpy as np
from jax.experimental import pallas as pl
from jax.experimental.pallas import tpu as pltpu


# Per-tile VMEM budget for the copy kernel.  Separate in/out VMEM blocks with
# default double-buffering -> <= 4 * _TILE_BYTES = 8 MiB of scoped VMEM:
# safe on v5e (16 MiB default), v6e (32 MiB) and v7x (32 MiB / 64 MiB phys).
_TILE_BYTES = 2 * 1024 * 1024
_LANE = 128
_SUBLANE = 8
_MAX_LANE_TILE_WIDTH = 2048  # lane width cap for the 1-D retile


def _copy_kernel(x_ref, o_ref):
    # Identity copy of one sublane/lane-dense tile.
    o_ref[...] = x_ref[...]


def _tile_dim(dim, unit, cap_elems):
    """Tile size along one dim: full dim if it fits the cap, else the largest
    multiple of `unit` <= cap (edge blocks handled by a cdiv grid)."""
    if dim <= cap_elems:
        return dim
    return max(unit, (cap_elems // unit) * unit)


def _pick_lane_width(n):
    """Lane width for retiling a flat array of n elements (n % 128 == 0):
    the largest multiple of 128 dividing n (capped) that still leaves >= 8
    sublane rows, falling back to the largest dividing width."""
    start = (min(_MAX_LANE_TILE_WIDTH, n) // _LANE) * _LANE
    best = None
    for lane in range(start, _LANE - 1, -_LANE):
        if n % lane == 0:
            if best is None:
                best = lane
            if n // lane >= _SUBLANE:
                return lane
    return best


def _tiled_identity_copy_2d(x2d):
    """HBM->VMEM->HBM identity copy of a 2-D array, aliased in-place."""
    rows, lanes = x2d.shape
    isz = jnp.dtype(x2d.dtype).itemsize

    # Lane-dense tile first (biggest measured lever for store-bound copies),
    # then fill the remaining per-tile byte budget with sublane rows.
    tl = _tile_dim(lanes, _LANE, max(_LANE, _TILE_BYTES // (_SUBLANE * isz)))
    tr = _tile_dim(rows, _SUBLANE, max(_SUBLANE, _TILE_BYTES // (tl * isz)))
    grid = (pl.cdiv(rows, tr), pl.cdiv(lanes, tl))

    # v7x has 2 TensorCores: give a "parallel" axis >= 2 programs whenever
    # there is enough work to split (neutral on v5e/v6e).
    if grid[0] * grid[1] == 1:
        if rows >= 2 * _SUBLANE:
            tr = max(_SUBLANE, ((rows // 2) // _SUBLANE) * _SUBLANE)
        elif lanes >= 2 * _LANE:
            tl = max(_LANE, ((lanes // 2) // _LANE) * _LANE)
        grid = (pl.cdiv(rows, tr), pl.cdiv(lanes, tl))

    return pl.pallas_call(
        _copy_kernel,
        out_shape=jax.ShapeDtypeStruct((rows, lanes), x2d.dtype),
        grid=grid,
        in_specs=[pl.BlockSpec((tr, tl), lambda i, j: (i, j))],
        out_specs=pl.BlockSpec((tr, tl), lambda i, j: (i, j)),
        # Output aliases the input buffer: no second HBM allocation (the
        # wrapper donates the input, so XLA needs no defensive copy).
        input_output_aliases={0: 0},
        compiler_params=pltpu.CompilerParams(
            dimension_semantics=("parallel", "parallel")),
        cost_estimate=pl.CostEstimate(
            flops=0, transcendentals=0,
            bytes_accessed=2 * rows * lanes * isz),
    )(x2d)


@functools.partial(jax.jit, static_argnums=(1,), donate_argnums=(0,))
def _unflatten_copy(x, out_shape):
    """Pallas copy path: retile into a sublane/lane-dense slab, copy, reshape."""
    n = x.size
    if n % _LANE == 0:
        # 1-D retile: full vreg occupancy even for tiny batch dims.
        lane_w = _pick_lane_width(n)
        slab = jnp.reshape(x, (n // lane_w, lane_w))
    else:
        # TODO(synk): lane-unfriendly element count; copy over (B, F) directly
        # (edge stores are masked -- perf only, still correct).
        slab = jnp.reshape(x, (out_shape[0], n // out_shape[0]))
    out = _tiled_identity_copy_2d(slab)
    return jnp.reshape(out, out_shape)


def _parse_unflatten_size(unflatten_size):
    if isinstance(unflatten_size, tuple):
        if len(unflatten_size) != 3:
            raise ValueError(
                f"unflatten_size tuple must be (c, h, w); got {unflatten_size!r}")
        c, h, w = (int(d) for d in unflatten_size)
    elif isinstance(unflatten_size, int):
        c, h, w = int(unflatten_size), 1, 1
    else:
        raise TypeError("unflatten_size must be an int or a (c, h, w) tuple")
    return c, h, w


def unflatten_forward(x, unflatten_size, *, force_copy_kernel=False):
    """UnFlatten.forward: x.view(B, c, h, w).

    Default path is a metadata-only jnp.reshape (zero HBM traffic) -- the
    PyTorch op is a view, so the fastest kernel is no kernel.  Pass
    force_copy_kernel=True to route through the Pallas identity-copy kernel
    (in-place at the HBM level via io-aliasing + buffer donation), for the
    case where a materialized pass over the data is explicitly required.
    """
    c, h, w = _parse_unflatten_size(unflatten_size)
    B = x.shape[0]
    F = c * h * w
    if x.size != B * F:
        raise ValueError(f"cannot view shape {x.shape} as ({B}, {c}, {h}, {w})")
    if not force_copy_kernel:
        return jnp.reshape(x, (B, c, h, w))
    return _unflatten_copy(x, (B, c, h, w))


if __name__ == "__main__":
    key = jax.random.PRNGKey(0)
    B, c, h, w = 2, 4, 16, 16

    # --- default path: metadata-only reshape (review's top recommendation) --
    x_view = jax.random.normal(key, (B, c * h * w), dtype=jnp.float32)
    ref = np.asarray(x_view).reshape(B, c, h, w)
    out_view = jax.block_until_ready(unflatten_forward(x_view, (c, h, w)))
    np.testing.assert_array_equal(np.asarray(out_view), ref)
    assert out_view.shape == (B, c, h, w) and out_view.dtype == x_view.dtype

    # --- explicit Pallas copy-kernel path (aliased + donated) ---------------
    x_kern = jax.random.normal(key, (B, c * h * w), dtype=jnp.float32)
    ref_kern = np.asarray(x_kern).reshape(B, c, h, w)
    out_kern = jax.block_until_ready(
        unflatten_forward(x_kern, (c, h, w), force_copy_kernel=True))
    # NOTE: x_kern's buffer is donated; do not touch x_kern after this point.
    np.testing.assert_array_equal(np.asarray(out_kern), ref_kern)
    assert out_kern.shape == (B, c, h, w) and out_kern.dtype == jnp.float32

    # --- int-argument path: UnFlatten(c) -> (B, c, 1, 1), kernel route ------
    x_int = jax.random.normal(jax.random.PRNGKey(1), (3, 32), dtype=jnp.float32)
    ref_int = np.asarray(x_int).reshape(3, 32, 1, 1)
    out_int = jax.block_until_ready(
        unflatten_forward(x_int, 32, force_copy_kernel=True))
    np.testing.assert_array_equal(np.asarray(out_int), ref_int)

    print("KERNEL_OK")
</pallas_src>

<mosaic_0001>
module attributes {stable_mosaic.version = 11 : i64} {
  func.func @_copy_kernel(%arg0: i32, %arg1: i32, %arg2: memref<8x128xf32, #tpu.memory_space<vmem>>, %arg3: memref<8x128xf32, #tpu.memory_space<vmem>>) attributes {dimension_semantics = [#tpu.dimension_semantics<parallel>, #tpu.dimension_semantics<parallel>], iteration_bounds = array<i64: 1, 2>, scalar_prefetch = 0 : i64, scratch_operands = 0 : i64, tpu.core_type = #tpu.core_type<tc>, window_params = [{transform_indices = @transform_0, window_bounds = array<i64: 8, 128>}, {transform_indices = @transform_1, window_bounds = array<i64: 8, 128>}]} {
    %c0 = arith.constant 0 : index
    %c0_0 = arith.constant 0 : index
    %0 = vector.load %arg2[%c0, %c0_0] : memref<8x128xf32, #tpu.memory_space<vmem>>, vector<8x128xf32>
    %c0_1 = arith.constant 0 : index
    %c0_2 = arith.constant 0 : index
    %1 = vector.load %arg3[%c0_1, %c0_2] : memref<8x128xf32, #tpu.memory_space<vmem>>, vector<8x128xf32>
    tpu.vector_store %arg3[%c0_1, %c0_2], %0 {strides = array<i32>} : memref<8x128xf32, #tpu.memory_space<vmem>>, vector<8x128xf32>,
    return
  }
  func.func @transform_0(%arg0: i32, %arg1: i32) -> (i32, i32) {
    %c0_i32 = arith.constant 0 : i32
    return %arg0, %arg1 : i32, i32
  }
  func.func @transform_1(%arg0: i32, %arg1: i32) -> (i32, i32) {
    %c0_i32 = arith.constant 0 : i32
    return %arg0, %arg1 : i32, i32
  }
}

</mosaic_0001>

<llo_original>
// kernel: _unflatten_copy.1
$region0: #{_unflatten_copy.1}
  #allocation0 [shape = 'u32[]', space=smem, size = 0x4, offset = 0x4, fixed_abs, tag = 'smem constant byte address 0x4 - core index']
  #allocation1 [shape = 'u32[144,128]{1,0:T(1,128)}', space=vmem, size = 0x12000, scoped, tag = 'internal scratch']
  %s0 = inlined_call_operand.vmem [shape: f32[8,256], index: 0, kind: input, shape index: {}, may-alias: {0,1}]
  %s1 = inlined_call_operand.vmem [shape: f32[8,256], index: 1, kind: output, shape index: {}, may-alias: {0,1}]
  %s2 = sld [smem:[#allocation0]]
  $region37: #{_unflatten_copy.1} parent=0
    _
  %s4 = ssub.s32 1, %s2
  %s5 = scalar_select 0, %s4, %s2
  loop: start=0, step=1, limit=4
  $region2: #{_unflatten_copy.1} parent=0 // loop_pre_header
    _
  $region3: #{_unflatten_copy.1} parent=0 // loop_header
    %s7 = sphi 0, %s11
    %p8 = scmp.ge.s32.totalorder %s7, 4
    %s14 = sphi 0, %s26
    %s15 = sphi 0, %s22
    %s16 = sphi 0, %s14
    %s17 = sphi 0, %s15
    %s18 = sphi 0, %s16
    %s19 = sphi 0, %s17
    %s31 = sphi 0, %s33
    %s34 = sphi 0, %s31
    %s35 = sphi 0, %s34
    %s51 = sphi 0, %s35
    %s59 = sphi 0, %s61
    %s62 = sphi 0, %s59
    %s63 = sphi 0, %s62
    %s79 = sphi 0, %s63
  $region4: #{_unflatten_copy.1} parent=0 // loop_header_branch
    %10 = sbr.rel (%p8) target = $region8
  $region5: #{_unflatten_copy.1} parent=0 // loop_body
    %s12 = ssub.s32 %s7, 1
    %s13 = ssub.s32 %s7, 2
    %s20 = sadd.s32 1, %s15
    %p21 = scmp.ge.s32.totalorder %s20, 2
    %s22 = scalar_select %p21, 0, %s20
    %s23 = sadd.s32 1, %s14
    %s24 = scalar_select %p21, %s23, %s14
    %p25 = scmp.ge.s32.totalorder %s24, 1
    %s26 = scalar_select %p25, 0, %s24
    %s27 = ssub.s32 %s14, %s26
    %s28 = ssub.s32 %s15, %s22
    %s29 = sor.u32 %s27, %s28
    %p30 = scmp.eq.s32.totalorder %s29, 0
    %s32 = sadd.s32 %s31, 1
    %s33 = scalar_select %p30, %s31, %s32
    %p36 = pneg %p30
    %p37 = scmp.eq.s32.totalorder %s7, 1
    %p38 = por %p36, %p37
    %p39 = scmp.ne.s32.totalorder %s31, %s34
    %p40 = scmp.eq.s32.totalorder %s7, 0
    %p41 = por %p39, %p40
    %p42 = scmp.ne.s32.totalorder %s31, %s34
    %p43 = scmp.eq.s32.totalorder %s12, 1
    %p44 = por %p42, %p43
    %p45 = scmp.ne.s32.totalorder %s34, %s35
    %p46 = scmp.eq.s32.totalorder %s12, 0
    %p47 = por %p45, %p46
    %p48 = scmp.ne.s32.totalorder %s34, %s35
    %p49 = scmp.eq.s32.totalorder %s13, 1
    %p50 = por %p48, %p49
    %p52 = scmp.ne.s32.totalorder %s35, %s51
    %p53 = scmp.eq.s32.totalorder %s13, 0
    %p54 = por %p52, %p53
    %s55 = ssub.s32 %s14, %s26
    %s56 = ssub.s32 %s15, %s22
    %s57 = sor.u32 %s55, %s56
    %p58 = scmp.eq.s32.totalorder %s57, 0
    %s60 = sadd.s32 %s59, 1
    %s61 = scalar_select %p58, %s59, %s60
    %p64 = pneg %p58
    %p65 = scmp.eq.s32.totalorder %s7, 1
    %p66 = por %p64, %p65
    %p67 = scmp.ne.s32.totalorder %s59, %s62
    %p68 = scmp.eq.s32.totalorder %s7, 0
    %p69 = por %p67, %p68
    %p70 = scmp.ne.s32.totalorder %s59, %s62
    %p71 = scmp.eq.s32.totalorder %s12, 1
    %p72 = por %p70, %p71
    %p73 = scmp.ne.s32.totalorder %s62, %s63
    %p74 = scmp.eq.s32.totalorder %s12, 0
    %p75 = por %p73, %p74
    %p76 = scmp.ne.s32.totalorder %s62, %s63
    %p77 = scmp.eq.s32.totalorder %s13, 1
    %p78 = por %p76, %p77
    %p80 = scmp.ne.s32.totalorder %s63, %s79
    %p81 = scmp.eq.s32.totalorder %s13, 0
    %p82 = por %p80, %p81
    %p83 = scmp.le.s32.totalorder 1, %s7
    %p84 = scmp.lt.s32.totalorder %s7, 3
    %p85 = pnand %p83, %p84
    %p86 = pneg %p85
    // Predicated region
    $region9: #{_unflatten_copy.1} parent=5 // pred_check
      _
    $region10: #{_unflatten_copy.1} parent=5 // pred_check_branch
      %88 = sbr.rel (%p85) target = $region12
    $region11: #{_unflatten_copy.1} parent=5 // pred_region
      %s89 = ssub.s32 %s7, 1
    $region12: #{_unflatten_copy.1} parent=5 // pred_fallthru
      _
    %p90 = scmp.lt.s32.totalorder %s7, 2
    // Predicated region
    $region13: #{_unflatten_copy.1} parent=5 // pred_check
      %p91 = pneg %p90
    $region14: #{_unflatten_copy.1} parent=5 // pred_check_branch
      %93 = sbr.rel (%p91) target = $region16
    $region15: #{_unflatten_copy.1} parent=5 // pred_region
      // Predicated region
      $region17: #{_unflatten_copy.1} parent=15 // pred_check
        %p94 = pneg %p41
      $region18: #{_unflatten_copy.1} parent=15 // pred_check_branch
        %96 = sbr.rel (%p94) target = $region20
      $region19: #{_unflatten_copy.1} parent=15 // pred_region
        %p97 = scmp.lt.s32.totalorder %s14, 0
        %s98 = scalar_select %p97, %s14, 0
        %p99 = scmp.lt.s32.totalorder %s15, 1
        %s100 = scalar_select %p99, %s15, 1
        %s101 = smul.addr %s98, 2
        %s102 = sadd.s32 %s100, %s101
        %s103 = smul.addr %s102, 8
        %s104 = scalar_lea.vmem %s0, %s103
      $region20: #{_unflatten_copy.1} parent=15 // pred_fallthru
        _
    $region16: #{_unflatten_copy.1} parent=5 // pred_fallthru
      _
    %p105 = scmp.le.s32.totalorder 1, %s7
    %p106 = scmp.lt.s32.totalorder %s7, 3
    %p107 = pnand %p105, %p106
    %p108 = pneg %p107
    // Predicated region
    $region21: #{_unflatten_copy.1} parent=5 // pred_check
      _
    $region22: #{_unflatten_copy.1} parent=5 // pred_check_branch
      %110 = sbr.rel (%p107) target = $region24
    $region23: #{_unflatten_copy.1} parent=5 // pred_region
      %s111 = ssub.s32 %s7, 1
      %p112 = scmp.lt.s32.totalorder %s16, 0
      %s113 = scalar_select %p112, %s16, 0
      %p114 = scmp.lt.s32.totalorder %s17, 1
      %s115 = scalar_select %p114, %s17, 1
      %s116 = smul.addr %s113, 2
      %s117 = sadd.s32 %s115, %s116
      %s118 = smul.addr %s117, 8
      %s119 = scalar_lea.vmem %s0, %s118
      %p120 = pneg %p47
      %p121 = pneg %p44
      %p122 = pneg %p75
      %p123 = pneg %p72
      %p124 = scmp.lt.s32.totalorder %s16, 0
      %s125 = scalar_select %p124, %s16, 0
      %p126 = scmp.lt.s32.totalorder %s17, 1
      %s127 = scalar_select %p126, %s17, 1
      %s128 = smul.addr %s125, 2
      %s129 = sadd.s32 %s127, %s128
      %s130 = smul.addr %s129, 8
      %s131 = scalar_lea.vmem %s1, %s130
      %p132 = scmp.lt.s32.totalorder %s16, 0
      %s133 = scalar_select %p132, %s16, 0
      %p134 = scmp.lt.s32.totalorder %s17, 1
      %s135 = scalar_select %p134, %s17, 1
      %s136 = smul.addr %s133, 2
      %s137 = sadd.s32 %s135, %s136
      %s138 = smul.addr %s137, 8
      %s139 = scalar_lea.vmem %s0, %s138
      %p140 = scmp.lt.s32.totalorder %s16, 0
      %s141 = scalar_select %p140, %s16, 0
      %p142 = scmp.lt.s32.totalorder %s17, 1
      %s143 = scalar_select %p142, %s17, 1
      %s144 = smul.addr %s141, 2
      %s145 = sadd.s32 %s143, %s144
      %s146 = smul.addr %s145, 8
      %s147 = scalar_lea.vmem %s1, %s146
      %v148 = vld [vmem:[%s139] sm:$0xff]
      %149 = vst [vmem:[%s147] sm:$0xff] %v148
      %p150 = scmp.lt.s32.totalorder %s16, 0
      %s151 = scalar_select %p150, %s16, 0
      %p152 = scmp.lt.s32.totalorder %s17, 1
      %s153 = scalar_select %p152, %s17, 1
      %s154 = smul.addr %s151, 2
      %s155 = sadd.s32 %s153, %s154
      %s156 = smul.addr %s155, 8
      %s157 = scalar_lea.vmem %s1, %s156
      // Predicated region
      $region25: #{_unflatten_copy.1} parent=23 // pred_check
        %p158 = pneg %p72
      $region26: #{_unflatten_copy.1} parent=23 // pred_check_branch
        %160 = sbr.rel (%p158) target = $region28
      $region27: #{_unflatten_copy.1} parent=23 // pred_region
        _
      $region28: #{_unflatten_copy.1} parent=23 // pred_fallthru
        _
    $region24: #{_unflatten_copy.1} parent=5 // pred_fallthru
      _
    %p161 = scmp.le.s32.totalorder 2, %s7
    // Predicated region
    $region29: #{_unflatten_copy.1} parent=5 // pred_check
      %p162 = pneg %p161
    $region30: #{_unflatten_copy.1} parent=5 // pred_check_branch
      %164 = sbr.rel (%p162) target = $region32
    $region31: #{_unflatten_copy.1} parent=5 // pred_region
      %s165 = ssub.s32 %s7, 2
      // Predicated region
      $region33: #{_unflatten_copy.1} parent=31 // pred_check
        %p166 = pneg %p78
      $region34: #{_unflatten_copy.1} parent=31 // pred_check_branch
        %168 = sbr.rel (%p166) target = $region36
      $region35: #{_unflatten_copy.1} parent=31 // pred_region
        %p169 = scmp.lt.s32.totalorder %s18, 0
        %s170 = scalar_select %p169, %s18, 0
        %p171 = scmp.lt.s32.totalorder %s19, 1
        %s172 = scalar_select %p171, %s19, 1
        %s173 = smul.addr %s170, 2
        %s174 = sadd.s32 %s172, %s173
        %s175 = smul.addr %s174, 8
        %s176 = scalar_lea.vmem %s1, %s175
      $region36: #{_unflatten_copy.1} parent=31 // pred_fallthru
        _
    $region32: #{_unflatten_copy.1} parent=5 // pred_fallthru
      _
  $region6: #{_unflatten_copy.1} parent=0 // loop_footer
    %s11 = sadd.s32 1, %s7
  $region7: #{_unflatten_copy.1} parent=0 // loop_footer_branch
    %6 = sbr.rel target = $region3
  $region8: #{_unflatten_copy.1} parent=0 // loop_exit
    _

</llo_original>
